<compile_context>
chip_gen: v7x
topology: tpu7x:2x2x1
jax: 0.10.0
libtpu: 0.0.40
codegen_flags: <defaults>
</compile_context>

<pallas_src>
import functools

import jax
import jax.numpy as jnp
from jax.experimental import pallas as pl
from jax.experimental.pallas import tpu as pltpu


def _perceptron_kernel(x_ref, w_ref, b_ref, o_ref, *, apply_relu):
    # x_ref: (C_in, TL)   w_ref: (TCO, C_in)   b_ref: (TCO, 1)   o_ref: (TCO, TL)
    acc = jnp.dot(w_ref[...], x_ref[...], preferred_element_type=jnp.float32)
    acc = acc + b_ref[...]  # f32 bias, broadcast over the lane (L) axis
    if apply_relu:
        # TODO(synk): the reference applies an external masked `layer_norm(features, masks)`
        # before ReLU when output_layer=False; its definition is not part of the module,
        # so only Conv1d + ReLU is reproduced here.
        acc = jnp.maximum(acc, 0.0)
    o_ref[...] = acc.astype(o_ref.dtype)


def _choose_tile(total, max_tile, multiple):
    """Full extent if it fits, else the largest tile <= max_tile that is a multiple of `multiple`."""
    if total <= max_tile:
        return total
    return max((max_tile // multiple) * multiple, multiple)


def perceptron_forward(
    features,
    masks,
    weight,
    bias,
    *,
    output_layer=True,
    compute_dtype=jnp.bfloat16,
    tile_l=512,        # lane-axis tile (multiple of 128); sized for v7x's 64 MiB VMEM
    tile_cout=256,     # output-channel tile (multiple of 8)
    vmem_limit_bytes=None,
):
    """features: (N, C_in, L), weight: (C_out, C_in), bias: (C_out,)."""
    del masks  # only consumed by the (external) layer_norm in the non-output-layer path
    N, C_in, L = features.shape
    C_out = weight.shape[0]

    TL = _choose_tile(L, tile_l, 128)
    TCO = _choose_tile(C_out, tile_cout, 8)

    # bf16 inputs/weights halve HBM bytes on this bandwidth-bound op; accumulate in f32.
    x = features.astype(compute_dtype)
    w = weight.astype(compute_dtype)
    b2 = bias.astype(jnp.float32).reshape(C_out, 1)

    if vmem_limit_bytes is None:
        cbytes = jnp.dtype(compute_dtype).itemsize
        obytes = jnp.dtype(features.dtype).itemsize
        # double-buffered x/out tiles + resident (double-buffered) W/bias tiles, with headroom
        est = 2 * (C_in * TL * cbytes + TCO * TL * obytes) + 2 * (TCO * C_in * cbytes + TCO * 128 * 4)
        vmem_limit_bytes = int(min(max(4 * est, 32 << 20), 48 << 20))  # v7x-safe cap

    kernel = functools.partial(_perceptron_kernel, apply_relu=not output_layer)

    grid = (N, pl.cdiv(C_out, TCO), pl.cdiv(L, TL))  # l innermost -> W/bias tile stays resident

    return pl.pallas_call(
        kernel,
        out_shape=jax.ShapeDtypeStruct((N, C_out, L), features.dtype),
        grid_spec=pltpu.PrefetchScalarGridSpec(
            num_scalar_prefetch=0,
            grid=grid,
            in_specs=[
                # x: squeeze batch dim, stream (C_in, TL) lane tiles.
                # (pipeline_mode=pl.Buffered(3) is a sweepable extra here; default 2 kept.)
                pl.BlockSpec((None, C_in, TL), lambda n, j, l: (n, 0, l)),
                # W: one (TCO, C_in) tile per j, re-used across the inner l loop.
                pl.BlockSpec((TCO, C_in), lambda n, j, l: (j, 0)),
                # bias: stays resident alongside its W tile.
                pl.BlockSpec((TCO, 1), lambda n, j, l: (j, 0)),
            ],
            out_specs=pl.BlockSpec((None, TCO, TL), lambda n, j, l: (n, j, l)),
        ),
        compiler_params=pltpu.CompilerParams(
            # every grid point writes a disjoint output block -> fully parallel
            dimension_semantics=("parallel", "parallel", "parallel"),
            vmem_limit_bytes=vmem_limit_bytes,
        ),
    )(x, w, b2)


if __name__ == "__main__":
    # Small NCL shapes implied by Conv1d(kernel_size=1); tile_l=128 so the lane-tiling
    # path (grid over L) is actually exercised at these sizes.
    N, C_in, C_out, L = 2, 16, 32, 256

    key = jax.random.PRNGKey(0)
    k_x, k_w, k_b, k_m = jax.random.split(key, 4)

    x = jax.random.normal(k_x, (N, C_in, L), dtype=jnp.float32)
    weight = jax.random.normal(k_w, (C_out, C_in), dtype=jnp.float32) * 0.05
    bias = jax.random.normal(k_b, (C_out,), dtype=jnp.float32) * 0.05
    masks = (jax.random.uniform(k_m, (N, L)) > 0.2).astype(jnp.float32)

    # output_layer=True path (pure pointwise conv + bias)
    out = perceptron_forward(x, masks, weight, bias, output_layer=True, tile_l=128)
    out = jax.block_until_ready(out)

    # Reference in plain JAX, using the same bf16-rounded inputs (f32 accumulation).
    xb = x.astype(jnp.bfloat16).astype(jnp.float32)
    wb = weight.astype(jnp.bfloat16).astype(jnp.float32)
    ref = jnp.einsum("oc,ncl->nol", wb, xb) + bias[None, :, None]
    assert out.shape == (N, C_out, L)
    assert jnp.allclose(out, ref, atol=1e-3, rtol=1e-3)

    # output_layer=False path (Conv1d + ReLU; external layer_norm not reproduced — see TODO).
    out2 = perceptron_forward(x, masks, weight, bias, output_layer=False, tile_l=128)
    out2 = jax.block_until_ready(out2)
    assert out2.shape == (N, C_out, L)
    assert bool(jnp.all(out2 >= 0.0))

    print("KERNEL_OK")
</pallas_src>

<mosaic_0001>
module attributes {stable_mosaic.version = 11 : i64} {
  func.func @_perceptron_kernel(%arg0: i32, %arg1: i32, %arg2: i32, %arg3: memref<1x16x128xbf16, #tpu.memory_space<vmem>>, %arg4: memref<32x16xbf16, #tpu.memory_space<vmem>>, %arg5: memref<32x1xf32, #tpu.memory_space<vmem>>, %arg6: memref<1x32x128xf32, #tpu.memory_space<vmem>>) attributes {dimension_semantics = [#tpu.dimension_semantics<parallel>, #tpu.dimension_semantics<parallel>, #tpu.dimension_semantics<parallel>], iteration_bounds = array<i64: 2, 1, 2>, scalar_prefetch = 0 : i64, scratch_operands = 0 : i64, tpu.core_type = #tpu.core_type<tc>, window_params = [{transform_indices = @transform_0, window_bounds = array<i64: 1, 16, 128>}, {transform_indices = @transform_1, window_bounds = array<i64: 32, 16>}, {transform_indices = @transform_2, window_bounds = array<i64: 32, 1>}, {transform_indices = @transform_3, window_bounds = array<i64: 1, 32, 128>}]} {
    %c0 = arith.constant 0 : index
    %c0_0 = arith.constant 0 : index
    %0 = vector.load %arg4[%c0, %c0_0] : memref<32x16xbf16, #tpu.memory_space<vmem>>, vector<32x16xbf16>
    %c0_1 = arith.constant 0 : index
    %c0_2 = arith.constant 0 : index
    %c0_3 = arith.constant 0 : index
    %1 = vector.load %arg3[%c0_1, %c0_2, %c0_3] : memref<1x16x128xbf16, #tpu.memory_space<vmem>>, vector<1x16x128xbf16>
    %2 = vector.shape_cast %1 : vector<1x16x128xbf16> to vector<16x128xbf16>
    %cst = arith.constant dense<0.000000e+00> : vector<32x128xf32>
    %3 = tpu.matmul %0, %2, %cst {dimension_numbers = #tpu.dot_dimension_numbers<[1], [0], [0], [1], [0, 0, 1, 1], [], []>} : vector<32x16xbf16>, vector<16x128xbf16>, vector<32x128xf32> -> vector<32x128xf32>
    %c0_4 = arith.constant 0 : index
    %c0_5 = arith.constant 0 : index
    %4 = vector.load %arg5[%c0_4, %c0_5] : memref<32x1xf32, #tpu.memory_space<vmem>>, vector<32x1xf32>
    %5 = vector.broadcast %4 : vector<32x1xf32> to vector<32x128xf32>
    %6 = arith.addf %3, %5 : vector<32x128xf32>
    %c0_6 = arith.constant 0 : index
    %c0_7 = arith.constant 0 : index
    %c0_8 = arith.constant 0 : index
    %7 = vector.load %arg6[%c0_6, %c0_7, %c0_8] : memref<1x32x128xf32, #tpu.memory_space<vmem>>, vector<1x32x128xf32>
    %8 = vector.shape_cast %7 : vector<1x32x128xf32> to vector<32x128xf32>
    %9 = vector.shape_cast %6 : vector<32x128xf32> to vector<1x32x128xf32>
    tpu.vector_store %arg6[%c0_6, %c0_7, %c0_8], %9 {strides = array<i32>} : memref<1x32x128xf32, #tpu.memory_space<vmem>>, vector<1x32x128xf32>,
    return
  }
  func.func @transform_0(%arg0: i32, %arg1: i32, %arg2: i32) -> (i32, i32, i32) {
    %c0_i32 = arith.constant 0 : i32
    %c0_i32_0 = arith.constant 0 : i32
    return %arg0, %c0_i32, %arg2 : i32, i32, i32
  }
  func.func @transform_1(%arg0: i32, %arg1: i32, %arg2: i32) -> (i32, i32) {
    %c0_i32 = arith.constant 0 : i32
    %c0_i32_0 = arith.constant 0 : i32
    return %arg1, %c0_i32 : i32, i32
  }
  func.func @transform_2(%arg0: i32, %arg1: i32, %arg2: i32) -> (i32, i32) {
    %c0_i32 = arith.constant 0 : i32
    %c0_i32_0 = arith.constant 0 : i32
    return %arg1, %c0_i32 : i32, i32
  }
  func.func @transform_3(%arg0: i32, %arg1: i32, %arg2: i32) -> (i32, i32, i32) {
    %c0_i32 = arith.constant 0 : i32
    return %arg0, %arg1, %arg2 : i32, i32, i32
  }
}

</mosaic_0001>

<llo_original>
// kernel: tpu_custom_call.1
$region0: #{tpu_custom_call.1}
  #allocation0 [shape = 'u32[]', space=smem, size = 0x4, offset = 0x4, fixed_abs, tag = 'smem constant byte address 0x4 - core index']
  #allocation1 [shape = 'u32[144,128]{1,0:T(1,128)}', space=vmem, size = 0x12000, scoped, tag = 'internal scratch']
  %s0 = inlined_call_operand.vmem [shape: bf16[2,16,256], index: 0, kind: input, shape index: {}]
  %s1 = inlined_call_operand.vmem [shape: bf16[32,16], index: 1, kind: input, shape index: {}]
  %s2 = inlined_call_operand.vmem [shape: f32[32,1], index: 2, kind: input, shape index: {}]
  %s3 = inlined_call_operand.hbm [shape: f32[2,32,256], index: 3, kind: output, shape index: {}]
  %s4 = sld [smem:[#allocation0]]
  $region86: #{tpu_custom_call.1} parent=0
    _
  %s6 = ssub.s32 1, %s4
  %s7 = scalar_select 0, %s6, %s4
  $region1: #{tpu_custom_call.1} parent=0
    #allocation2 [shape = 'u8[8192]{0}', space=vmem, size = 0x2000, scoped, tag = 'input window, operand 0']
    #allocation3 [shape = 'u8[32768]{0}', space=vmem, size = 0x8000, scoped, tag = 'output window, operand 0']
    #allocation4 [shape = 's32[2]{0}', space=sflag, size = 0x8, scoped, tag = 'scoped memory for tpu_custom_call.1']
    %8 = vsyncpa [#allocation4], 0
    %s9 = scalar_lea.sflag [#allocation4], 1
    %10 = vsyncpa %s9, 0
    loop: start=0, step=1, limit=6
    $region2: #{tpu_custom_call.1} parent=1 // loop_pre_header
      _
    $region3: #{tpu_custom_call.1} parent=1 // loop_header
      %s12 = sphi 0, %s16
      %p13 = scmp.ge.s32.totalorder %s12, 6
      %s19 = sphi 0, %s38
      %s20 = sphi 0, %s34
      %s21 = sphi 0, %s30
      %s22 = sphi 0, %s19
      %s23 = sphi 0, %s20
      %s24 = sphi 0, %s21
      %s25 = sphi 0, %s22
      %s26 = sphi 0, %s23
      %s27 = sphi 0, %s24
      %s43 = sphi 0, %s45
      %s46 = sphi 0, %s43
      %s47 = sphi 0, %s46
      %s63 = sphi 0, %s47
      %s69 = sphi 0, %s71
      %s72 = sphi 0, %s69
      %s73 = sphi 0, %s72
      %s89 = sphi 0, %s73
      %s95 = sphi 0, %s97
      %s98 = sphi 0, %s95
      %s99 = sphi 0, %s98
      %s115 = sphi 0, %s99
      %s125 = sphi 0, %s127
      %s128 = sphi 0, %s125
      %s129 = sphi 0, %s128
      %s145 = sphi 0, %s129
    $region4: #{tpu_custom_call.1} parent=1 // loop_header_branch
      %15 = sbr.rel (%p13) target = $region8
    $region5: #{tpu_custom_call.1} parent=1 // loop_body
      %s17 = ssub.s32 %s12, 1
      %s18 = ssub.s32 %s12, 2
      %s28 = sadd.s32 1, %s21
      %p29 = scmp.ge.s32.totalorder %s28, 2
      %s30 = scalar_select %p29, 0, %s28
      %s31 = sadd.s32 1, %s20
      %s32 = scalar_select %p29, %s31, %s20
      %p33 = scmp.ge.s32.totalorder %s32, 1
      %s34 = scalar_select %p33, 0, %s32
      %s35 = sadd.s32 1, %s19
      %s36 = scalar_select %p33, %s35, %s19
      %p37 = scmp.ge.s32.totalorder %s36, 2
      %s38 = scalar_select %p37, 0, %s36
      %s39 = ssub.s32 %s19, %s38
      %s40 = ssub.s32 %s21, %s30
      %s41 = sor.u32 %s39, %s40
      %p42 = scmp.eq.s32.totalorder %s41, 0
      %s44 = sadd.s32 %s43, 1
      %s45 = scalar_select %p42, %s43, %s44
      %p48 = pneg %p42
      %p49 = scmp.eq.s32.totalorder %s12, 3
      %p50 = por %p48, %p49
      %p51 = scmp.ne.s32.totalorder %s43, %s46
      %p52 = scmp.eq.s32.totalorder %s12, 0
      %p53 = por %p51, %p52
      %p54 = scmp.ne.s32.totalorder %s43, %s46
      %p55 = scmp.eq.s32.totalorder %s17, 3
      %p56 = por %p54, %p55
      %p57 = scmp.ne.s32.totalorder %s46, %s47
      %p58 = scmp.eq.s32.totalorder %s17, 0
      %p59 = por %p57, %p58
      %p60 = scmp.ne.s32.totalorder %s46, %s47
      %p61 = scmp.eq.s32.totalorder %s18, 3
      %p62 = por %p60, %p61
      %p64 = scmp.ne.s32.totalorder %s47, %s63
      %p65 = scmp.eq.s32.totalorder %s18, 0
      %p66 = por %p64, %p65
      %s67 = ssub.s32 %s20, %s34
      %p68 = scmp.eq.s32.totalorder %s67, 0
      %s70 = sadd.s32 %s69, 1
      %s71 = scalar_select %p68, %s69, %s70
      %p74 = pneg %p68
      %p75 = scmp.eq.s32.totalorder %s12, 3
      %p76 = por %p74, %p75
      %p77 = scmp.ne.s32.totalorder %s69, %s72
      %p78 = scmp.eq.s32.totalorder %s12, 0
      %p79 = por %p77, %p78
      %p80 = scmp.ne.s32.totalorder %s69, %s72
      %p81 = scmp.eq.s32.totalorder %s17, 3
      %p82 = por %p80, %p81
      %p83 = scmp.ne.s32.totalorder %s72, %s73
      %p84 = scmp.eq.s32.totalorder %s17, 0
      %p85 = por %p83, %p84
      %p86 = scmp.ne.s32.totalorder %s72, %s73
      %p87 = scmp.eq.s32.totalorder %s18, 3
      %p88 = por %p86, %p87
      %p90 = scmp.ne.s32.totalorder %s73, %s89
      %p91 = scmp.eq.s32.totalorder %s18, 0
      %p92 = por %p90, %p91
      %s93 = ssub.s32 %s20, %s34
      %p94 = scmp.eq.s32.totalorder %s93, 0
      %s96 = sadd.s32 %s95, 1
      %s97 = scalar_select %p94, %s95, %s96
      %p100 = pneg %p94
      %p101 = scmp.eq.s32.totalorder %s12, 3
      %p102 = por %p100, %p101
      %p103 = scmp.ne.s32.totalorder %s95, %s98
      %p104 = scmp.eq.s32.totalorder %s12, 0
      %p105 = por %p103, %p104
      %p106 = scmp.ne.s32.totalorder %s95, %s98
      %p107 = scmp.eq.s32.totalorder %s17, 3
      %p108 = por %p106, %p107
      %p109 = scmp.ne.s32.totalorder %s98, %s99
      %p110 = scmp.eq.s32.totalorder %s17, 0
      %p111 = por %p109, %p110
      %p112 = scmp.ne.s32.totalorder %s98, %s99
      %p113 = scmp.eq.s32.totalorder %s18, 3
      %p114 = por %p112, %p113
      %p116 = scmp.ne.s32.totalorder %s99, %s115
      %p117 = scmp.eq.s32.totalorder %s18, 0
      %p118 = por %p116, %p117
      %s119 = ssub.s32 %s19, %s38
      %s120 = ssub.s32 %s20, %s34
      %s121 = sor.u32 %s119, %s120
      %s122 = ssub.s32 %s21, %s30
      %s123 = sor.u32 %s121, %s122
      %p124 = scmp.eq.s32.totalorder %s123, 0
      %s126 = sadd.s32 %s125, 1
      %s127 = scalar_select %p124, %s125, %s126
      %p130 = pneg %p124
      %p131 = scmp.eq.s32.totalorder %s12, 3
      %p132 = por %p130, %p131
      %p133 = scmp.ne.s32.totalorder %s125, %s128
      %p134 = scmp.eq.s32.totalorder %s12, 0
      %p135 = por %p133, %p134
      %p136 = scmp.ne.s32.totalorder %s125, %s128
      %p137 = scmp.eq.s32.totalorder %s17, 3
      %p138 = por %p136, %p137
      %p139 = scmp.ne.s32.totalorder %s128, %s129
      %p140 = scmp.eq.s32.totalorder %s17, 0
      %p141 = por %p139, %p140
      %p142 = scmp.ne.s32.totalorder %s128, %s129
      %p143 = scmp.eq.s32.totalorder %s18, 3
      %p144 = por %p142, %p143
      %p146 = scmp.ne.s32.totalorder %s129, %s145
      %p147 = scmp.eq.s32.totalorder %s18, 0
      %p148 = por %p146, %p147
      %p149 = scmp.le.s32.totalorder 1, %s12
      %p150 = scmp.lt.s32.totalorder %s12, 5
      %p151 = pnand %p149, %p150
      %p152 = pneg %p151
      // Predicated region
      $region9: #{tpu_custom_call.1} parent=5 // pred_check
        _
      $region10: #{tpu_custom_call.1} parent=5 // pred_check_branch
        %154 = sbr.rel (%p151) target = $region12
      $region11: #{tpu_custom_call.1} parent=5 // pred_region
        %s155 = ssub.s32 %s12, 1
        // Predicated region
        $region13: #{tpu_custom_call.1} parent=11 // pred_check
          %p156 = pneg %p85
        $region14: #{tpu_custom_call.1} parent=11 // pred_check_branch
          %158 = sbr.rel (%p156) target = $region16
        $region15: #{tpu_custom_call.1} parent=11 // pred_region
          %s159 = smul.u32 4, %s23
          %p160 = scmp.lt.s32.totalorder %s159, 3
          %s161 = scalar_select %p160, %s159, 3
          %s162 = smul.addr %s161, 4
          %s163 = scalar_lea.vmem %s1, %s162
          %s164 = smul.u32 4, %s23
        $region16: #{tpu_custom_call.1} parent=11 // pred_fallthru
          _
        // Predicated region
        $region17: #{tpu_custom_call.1} parent=11 // pred_check
          %p165 = pneg %p111
        $region18: #{tpu_custom_call.1} parent=11 // pred_check_branch
          %167 = sbr.rel (%p165) target = $region20
        $region19: #{tpu_custom_call.1} parent=11 // pred_region
          %s168 = smul.u32 4, %s23
          %p169 = scmp.lt.s32.totalorder %s168, 3
          %s170 = scalar_select %p169, %s168, 3
          %s171 = smul.addr %s170, 8
          %s172 = scalar_lea.vmem %s2, %s171
          %s173 = smul.u32 4, %s23
        $region20: #{tpu_custom_call.1} parent=11 // pred_fallthru
          _
      $region12: #{tpu_custom_call.1} parent=5 // pred_fallthru
        _
      %p174 = scmp.lt.s32.totalorder %s12, 4
      // Predicated region
      $region21: #{tpu_custom_call.1} parent=5 // pred_check
        %p175 = pneg %p174
      $region22: #{tpu_custom_call.1} parent=5 // pred_check_branch
        %177 = sbr.rel (%p175) target = $region24
      $region23: #{tpu_custom_call.1} parent=5 // pred_region
        // Predicated region
        $region25: #{tpu_custom_call.1} parent=23 // pred_check
          %p178 = pneg %p53
        $region26: #{tpu_custom_call.1} parent=23 // pred_check_branch
          %180 = sbr.rel (%p178) target = $region28
        $region27: #{tpu_custom_call.1} parent=23 // pred_region
          %s181 = sand.u32 %s43, 1
          %s182 = sand.u32 %s43, 1
          %s183 = smul.addr %s182, 8
          %s184 = scalar_lea.vmem [#allocation2], %s183
          %s185 = smul.addr %s19, 4
          %s186 = sadd.s32 %s21, %s185
          %s187 = smul.addr %s186, 4
          %s188 = scalar_lea.vmem %s0, %s187
          // Predicated region
          $region29: #{tpu_custom_call.1} parent=27 // pred_check
            _
          $region30: #{tpu_custom_call.1} parent=27 // pred_check_branch
            %190 = sbr.rel (0) target = $region32
          $region31: #{tpu_custom_call.1} parent=27 // pred_region
            // Predicated region
            $region33: #{tpu_custom_call.1} parent=31 // pred_check
              _
            $region34: #{tpu_custom_call.1} parent=31 // pred_check_branch
              %192 = sbr.rel target = $region36
            $region35: #{tpu_custom_call.1} parent=31 // pred_region
              // Predicated region
              $region48: #{tpu_custom_call.1} parent=35 // pred_check
                _
              $region49: #{tpu_custom_call.1} parent=35 // pred_check_branch
                %209 = sbr.rel (0) target = $region51
              $region50: #{tpu_custom_call.1} parent=35 // pred_region
                loop: start=0, step=1, limit=1
                $region52: #{tpu_custom_call.1} parent=50 // loop_pre_header
                  _
                $region53: #{tpu_custom_call.1} parent=50 // loop_header
                  %s211 = sphi 0, %s215
                  %p212 = scmp.ge.s32.totalorder %s211, 1
                  %s216 = sphi %s188, %s188
                  %s217 = sphi %s184, %s184
                $region54: #{tpu_custom_call.1} parent=50 // loop_header_branch
                  %214 = sbr.rel (%p212) target = $region58
                $region55: #{tpu_custom_call.1} parent=50 // loop_body
                  _
                $region56: #{tpu_custom_call.1} parent=50 // loop_footer
                  %s215 = sadd.s32 1, %s211
                $region57: #{tpu_custom_call.1} parent=50 // loop_footer_branch
                  %210 = sbr.rel target = $region53
                $region58: #{tpu_custom_call.1} parent=50 // loop_exit
                  _
                loop: start=0, step=1, limit=1
                $region59: #{tpu_custom_call.1} parent=50 // loop_pre_header
                  _
                $region60: #{tpu_custom_call.1} parent=50 // loop_header
                  %s220 = sphi 0, %s224
                  %p221 = scmp.ge.s32.totalorder %s220, 1
                  %s225 = sphi %s188, %s188
                  %s226 = sphi %s184, %s184
                $region61: #{tpu_custom_call.1} parent=50 // loop_header_branch
                  %223 = sbr.rel (%p221) target = $region65
                $region62: #{tpu_custom_call.1} parent=50 // loop_body
                  %v227 = vld [vmem:[%s225] sm:$0xf]
                  %228 = vst [vmem:[%s226] sm:$0xf] %v227
                  %v229 = vld [vmem:[%s225 + $0x8] sm:$0xf]
                  %230 = vst [vmem:[%s226 + $0x4] sm:$0xf] %v229
                $region63: #{tpu_custom_call.1} parent=50 // loop_footer
                  %s224 = sadd.s32 1, %s220
                $region64: #{tpu_custom_call.1} parent=50 // loop_footer_branch
                  %219 = sbr.rel target = $region60
                $region65: #{tpu_custom_call.1} parent=50 // loop_exit
                  _
              $region51: #{tpu_custom_call.1} parent=35 // pred_fallthru
                _
            $region36: #{tpu_custom_call.1} parent=31 // pred_fallthru
              _
            // Predicated region
            $region37: #{tpu_custom_call.1} parent=31 // pred_check
              _
            $region38: #{tpu_custom_call.1} parent=31 // pred_check_branch
              %194 = sbr.rel (0) target = $region40
            $region39: #{tpu_custom_call.1} parent=31 // pred_region
              loop: start=0, step=1, limit=1
              $region41: #{tpu_custom_call.1} parent=39 // loop_pre_header
                _
              $region42: #{tpu_custom_call.1} parent=39 // loop_header
                %s197 = sphi 0, %s201
                %p198 = scmp.ge.s32.totalorder %s197, 1
                %s202 = sphi %s188, %s188
                %s203 = sphi %s184, %s184
              $region43: #{tpu_custom_call.1} parent=39 // loop_header_branch
                %200 = sbr.rel (%p198) target = $region47
              $region44: #{tpu_custom_call.1} parent=39 // loop_body
                %v204 = vld [vmem:[%s202] sm:$0xf]
                %205 = vst [vmem:[%s203] sm:$0xf] %v204
                %v206 = vld [vmem:[%s202 + $0x8] sm:$0xf]
                %207 = vst [vmem:[%s203 + $0x4] sm:$0xf] %v206
              $region45: #{tpu_custom_call.1} parent=39 // loop_footer
                %s201 = sadd.s32 1, %s197
              $region46: #{tpu_custom_call.1} parent=39 // loop_footer_branch
                %196 = sbr.rel target = $region42
              $region47: #{tpu_custom_call.1} parent=39 // loop_exit
                _
            $region40: #{tpu_custom_call.1} parent=31 // pred_fallthru
              _
          $region32: #{tpu_custom_call.1} parent=27 // pred_fallthru
            _
          %231 = vnop
        $region28: #{tpu_custom_call.1} parent=23 // pred_fallthru
          _
      $region24: #{tpu_custom_call.1} parent=5 // pred_fallthru
        _
      %p232 = scmp.le.s32.totalorder 1, %s12
      %p233 = scmp.lt.s32.totalorder %s12, 5
      %p234 = pnand %p232, %p233
      %p235 = pneg %p234
      // Predicated region
      $region66: #{tpu_custom_call.1} parent=5 // pred_check
        _
      $region67: #{tpu_custom_call.1} parent=5 // pred_check_branch
        %237 = sbr.rel (%p234) target = $region69
      $region68: #{tpu_custom_call.1} parent=5 // pred_region
        %s238 = ssub.s32 %s12, 1
        %s239 = sand.u32 %s46, 1
        %s240 = sand.u32 %s46, 1
        %s241 = smul.addr %s240, 8
        %s242 = scalar_lea.vmem [#allocation2], %s241
        // Predicated region
        $region70: #{tpu_custom_call.1} parent=68 // pred_check
          %p243 = pneg %p59
        $region71: #{tpu_custom_call.1} parent=68 // pred_check_branch
          %245 = sbr.rel (%p243) target = $region73
        $region72: #{tpu_custom_call.1} parent=68 // pred_region
          _
        $region73: #{tpu_custom_call.1} parent=68 // pred_fallthru
          _
        %s246 = sand.u32 %s46, 1
        %s247 = sand.u32 %s46, 1
        %s248 = smul.addr %s247, 8
        %s249 = scalar_lea.vmem [#allocation2], %s248
        %p250 = pneg %p59
        %p251 = pneg %p56
        %s252 = smul.u32 4, %s23
        %p253 = scmp.lt.s32.totalorder %s252, 3
        %s254 = scalar_select %p253, %s252, 3
        %s255 = smul.addr %s254, 4
        %s256 = scalar_lea.vmem %s1, %s255
        %p257 = pneg %p85
        %p258 = pneg %p82
        %s259 = smul.u32 4, %s23
        %p260 = scmp.lt.s32.totalorder %s259, 3
        %s261 = scalar_select %p260, %s259, 3
        %s262 = smul.addr %s261, 8
        %s263 = scalar_lea.vmem %s2, %s262
        %p264 = pneg %p111
        %p265 = pneg %p108
        %p266 = pneg %p141
        %p267 = pneg %p138
        %s268 = sand.u32 %s128, 1
        %s269 = scalar_lea.sflag [#allocation4], %s268
        %s270 = sand.u32 %s128, 1
        %s271 = smul.addr %s270, 32
        %s272 = scalar_lea.vmem [#allocation3], %s271
        %s273 = smul.u32 4, %s23
        %p274 = scmp.lt.s32.totalorder %s273, 3
        %s275 = scalar_select %p274, %s273, 3
        %s276 = smul.addr %s275, 4
        %s277 = scalar_lea.vmem %s1, %s276
        %s278 = smul.u32 4, %s23
        %s279 = smul.u32 4, %s23
        %p280 = scmp.lt.s32.totalorder %s279, 3
        %s281 = scalar_select %p280, %s279, 3
        %s282 = smul.addr %s281, 8
        %s283 = scalar_lea.vmem %s2, %s282
        %s284 = smul.u32 4, %s23
        %s285 = smul.u32 4, %s23
        %v287 = vld [vmem:[%s277] sm:$0xf]
        %v288 = vld [vmem:[%s277 + $0x4] sm:$0xf]
        %v289 = vld [vmem:[%s277 + $0x8] sm:$0xf]
        %v290 = vld [vmem:[%s277 + $0xc] sm:$0xf]
        %v291 = vld [vmem:[%s242] sm:$0xf]
        %v292 = vld [vmem:[%s242 + $0x4] sm:$0xf]
        %v293 = vld [vmem:[%s283] sm:$0xff]
        %v294 = vld [vmem:[%s283 + $0x8] sm:$0xff]
        %v295 = vld [vmem:[%s283 + $0x10] sm:$0xff]
        %v296 = vld [vmem:[%s283 + $0x18] sm:$0xff]
        %298 = vset.pattern.permute.xlu0 0
        %299 = vperm.xlu0 %298, %v293
        %v300 = vpop.permute.xlu0 %299
        %303 = vset.pattern.permute.xlu0 0
        %304 = vperm.xlu0 %303, %v294
        %v305 = vpop.permute.xlu0 %304
        %308 = vset.pattern.permute.xlu0 0
        %309 = vperm.xlu0 %308, %v295
        %v310 = vpop.permute.xlu0 %309
        %313 = vset.pattern.permute.xlu0 0
        %314 = vperm.xlu0 %313, %v296
        %v315 = vpop.permute.xlu0 %314
        %v321 = vunpack.c.l.b16 %v287
        %v322 = vunpack.c.l.b16 %v288
        %v323 = vunpack.c.l.b16 %v289
        %v324 = vunpack.c.l.b16 %v290
        %v325 = vpack.c.b16 %v322, %v321
        %v326 = vpack.c.b16 %v324, %v323
        %v329 = vunpack.c.l.b16 %v291
        %v330 = vunpack.c.l.b16 %v292
        %v331 = vpack.c.b16 %v330, %v329
        %vm333 = vcmask 130048
        %v335 = vsel %vm333, %v325, 0
        %v338 = vsel %vm333, %v326, 0
        %340 = vmatprep.subr.bf16.mxu0 0
        %341 = vmatpush1.bf16.msra.mxu0 %v331
        %342 = vmatprep.subr.bf16.mxu0 0
        %343 = vmatpush1.bf16.msra.mxu0 0
        %344 = vmatprep.subr.bf16.mxu0 0
        %345 = vmatpush1.bf16.msra.mxu0 0
        %346 = vmatprep.subr.bf16.mxu0 0
        %347 = vmatpush1.bf16.msra.mxu0 0
        %348 = vmatprep.subr.bf16.mxu0 0
        %349 = vmatpush1.bf16.msra.mxu0 0
        %350 = vmatprep.subr.bf16.mxu0 0
        %351 = vmatpush1.bf16.msra.mxu0 0
        %352 = vmatprep.subr.bf16.mxu0 0
        %353 = vmatpush1.bf16.msra.mxu0 0
        %354 = vmatprep.subr.bf16.mxu0 0
        %355 = vmatpush1.bf16.msra.mxu0 0
        %356 = vmatprep.subr.bf16.mxu0 0
        %357 = vmatpush1.bf16.msra.mxu0 0
        %358 = vmatprep.subr.bf16.mxu0 0
        %359 = vmatpush1.bf16.msra.mxu0 0
        %360 = vmatprep.subr.bf16.mxu0 0
        %361 = vmatpush1.bf16.msra.mxu0 0
        %362 = vmatprep.subr.bf16.mxu0 0
        %363 = vmatpush1.bf16.msra.mxu0 0
        %364 = vmatprep.subr.bf16.mxu0 0
        %365 = vmatpush1.bf16.msra.mxu0 0
        %366 = vmatprep.subr.bf16.mxu0 0
        %367 = vmatpush1.bf16.msra.mxu0 0
        %368 = vmatprep.subr.bf16.mxu0 0
        %369 = vmatpush1.bf16.msra.mxu0 0
        %370 = vmatprep.subr.bf16.mxu0 0
        %371 = vmatpush1.bf16.msra.mxu0 0
        %372 = vmatprep.mubr.bf16.mxu0 0
        %373 = vmatmul.mubr.bf16.gmra.mrb[0].mxu0 %v335
        %v374 = vpop.f32.mrb[0].mxu0
        %v375 = vadd.f32 %v300, %v374
        %v376 = vpop.f32.mrb[0].mxu0
        %v377 = vpop.f32.mrb[0].mxu0
        %v378 = vadd.f32 %v305, %v377
        %v379 = vpop.f32.mrb[0].mxu0
        %380 = vmatprep.mubr.bf16.mxu0 0
        %381 = vmatmul.mubr.bf16.gmra.mrb[0].mxu0 %v338
        %v382 = vpop.f32.mrb[0].mxu0
        %v383 = vadd.f32 %v310, %v382
        %v384 = vpop.f32.mrb[0].mxu0
        %v385 = vpop.f32.mrb[0].mxu0
        %v386 = vadd.f32 %v315, %v385
        %v387 = vpop.f32.mrb[0].mxu0
        %388 = vdwg.mxu0
        %389 = vst [vmem:[%s272] sm:$0xff] %v375
        %390 = vst [vmem:[%s272 + $0x8] sm:$0xff] %v378
        %391 = vst [vmem:[%s272 + $0x10] sm:$0xff] %v383
        %392 = vst [vmem:[%s272 + $0x18] sm:$0xff] %v386
        %s393 = sand.u32 %s128, 1
        %s394 = scalar_lea.sflag [#allocation4], %s393
        %s395 = sand.u32 %s128, 1
        %s396 = smul.addr %s395, 32
        %s397 = scalar_lea.vmem [#allocation3], %s396
        // Predicated region
        $region74: #{tpu_custom_call.1} parent=68 // pred_check
          %p398 = pneg %p138
        $region75: #{tpu_custom_call.1} parent=68 // pred_check_branch
          %400 = sbr.rel (%p398) target = $region77
        $region76: #{tpu_custom_call.1} parent=68 // pred_region
          %s401 = smul.u32 4, %s23
          %s403 = ssub.s32 512, 512
          %404 = vsyncadd %s394, %s403
          %s405 = smul.addr %s401, 2
          %s406 = sadd.s32 %s24, %s405
          %s407 = smul.addr %s22, 8
          %s408 = sadd.s32 %s406, %s407
          %s409 = smul.addr %s408, 128
          %s410 = scalar_lea.hbm %s3, %s409
          %s411 = sshll.u32 %s397, 4
          %s412 = int_to_ptr.vmem [resolvable:$true] %s411
          %417 = dma.vmem_to_hbm [thread:$0]  %s412, 512, %s410, %s394, 128, 256, 8
        $region77: #{tpu_custom_call.1} parent=68 // pred_fallthru
          _
      $region69: #{tpu_custom_call.1} parent=5 // pred_fallthru
        _
      %p418 = scmp.le.s32.totalorder 2, %s12
      // Predicated region
      $region78: #{tpu_custom_call.1} parent=5 // pred_check
        %p419 = pneg %p418
      $region79: #{tpu_custom_call.1} parent=5 // pred_check_branch
        %421 = sbr.rel (%p419) target = $region81
      $region80: #{tpu_custom_call.1} parent=5 // pred_region
        %s422 = ssub.s32 %s12, 2
        // Predicated region
        $region82: #{tpu_custom_call.1} parent=80 // pred_check
          %p423 = pneg %p144
        $region83: #{tpu_custom_call.1} parent=80 // pred_check_branch
          %425 = sbr.rel (%p423) target = $region85
        $region84: #{tpu_custom_call.1} parent=80 // pred_region
          %s426 = sand.u32 %s129, 1
          %s427 = scalar_lea.sflag [#allocation4], %s426
          %s428 = sand.u32 %s129, 1
          %s429 = smul.addr %s428, 32
          %s430 = scalar_lea.vmem [#allocation3], %s429
          %431 = dma.done %s427, 512
        $region85: #{tpu_custom_call.1} parent=80 // pred_fallthru
          _
      $region81: #{tpu_custom_call.1} parent=5 // pred_fallthru
        _
    $region6: #{tpu_custom_call.1} parent=1 // loop_footer
      %s16 = sadd.s32 1, %s12
    $region7: #{tpu_custom_call.1} parent=1 // loop_footer_branch
      %11 = sbr.rel target = $region3
    $region8: #{tpu_custom_call.1} parent=1 // loop_exit
      _
    %432 = vsyncpa [#allocation4], 1
    %s433 = scalar_lea.sflag [#allocation4], 1
    %434 = vsyncpa %s433, 1

</llo_original>
